<compile_context>
chip_gen: v7x
topology: tpu7x:2x2x1
jax: 0.10.0
libtpu: 0.0.40
codegen_flags: <defaults>
</compile_context>

<pallas_src>
import functools

import jax
import jax.numpy as jnp
from jax import lax
from jax.experimental import pallas as pl
from jax.experimental.pallas import tpu as pltpu


# ----------------------------------------------------------------------------
# Kernel
# ----------------------------------------------------------------------------
def _mdca_kernel(logits_ref, conf_ref, *, batch, inner_tiles):
    """Accumulate the per-class column sum of softmax(logits) over batch tiles."""
    s = pl.program_id(0)          # parallel split (dual TensorCore on v7x)
    i = pl.program_id(1)          # sequential batch-tile index within the split

    @pl.when(i == 0)
    def _init():
        conf_ref[...] = jnp.zeros_like(conf_ref)

    x = logits_ref[...].astype(jnp.float32)            # (TB, C) native-dtype ingest
    tb, _ = x.shape

    def _softmax(xt):
        m = jnp.max(xt, axis=1, keepdims=True)
        e = jnp.exp(xt - m)
        denom = jnp.sum(e, axis=1, keepdims=True)
        # exact reciprocal (one per row) + per-element multiply
        return e * pl.reciprocal(denom, approx=False)

    # Row masking is only needed when this tile extends past the real batch:
    # the batch tail and redundant clamped steps of the parallel split.
    logical_tile = s * inner_tiles + i
    tile_end = (logical_tile + 1) * tb

    @pl.when(tile_end <= batch)
    def _steady():                                     # fully valid tile: mask-free
        p = _softmax(x)
        conf_ref[...] += jnp.sum(p, axis=0, keepdims=True)[None]

    @pl.when(tile_end > batch)
    def _tail():                                       # tail / redundant tile
        row = logical_tile * tb + lax.broadcasted_iota(jnp.int32, (tb, 1), 0)
        valid = row < batch                            # (TB, 1) bool
        p = _softmax(jnp.where(valid, x, 0.0))         # keep exp/max off garbage rows
        p = jnp.where(valid, p, 0.0)
        conf_ref[...] += jnp.sum(p, axis=0, keepdims=True)[None]


# ----------------------------------------------------------------------------
# Sizing helpers
# ----------------------------------------------------------------------------
def _vmem_limit_bytes():
    """Generation-aware scoped-VMEM request (leaves headroom below physical)."""
    cap = 64 * 1024 * 1024
    try:
        info = pltpu.get_tpu_info()
        cap = int(getattr(info, "vmem_capacity_bytes", cap) or cap)
    except Exception:
        pass
    # ~48 MiB on v7x (64 MiB physical), ~96 MiB on v5e/v6e (128 MiB physical).
    return min(cap * 3 // 4, 96 * 1024 * 1024)


def _num_parallel_splits():
    """2 when the chip has two TensorCores (v7x / megacore), else 1."""
    try:
        kind = jax.devices()[0].device_kind.lower()
    except Exception:
        return 1
    if "v7" in kind or "v4" in kind:
        return 2
    if "v5" in kind and "lite" not in kind and "v5e" not in kind:   # v5p megacore
        return 2
    return 1


def _choose_block_rows(batch, classes, itemsize):
    """Largest tile whose real VMEM footprint fits the scoped budget."""
    del batch
    c_pad = ((classes + 127) // 128) * 128             # Mosaic lane-pads to 128
    budget = int(_vmem_limit_bytes() * 0.8)
    # per row: 2 double-buffered native-dtype input tiles (lane-padded)
    #          + ~4 live f32 temporaries (x, x-m, e, p) from the in-kernel softmax
    bytes_per_row = c_pad * (2 * itemsize + 4 * 4)
    tb = budget // max(1, bytes_per_row)
    align = max(8, 32 // itemsize)                     # 8 f32 / 16 bf16 / 32 int8
    tb = max(align, tb - (tb % align))
    return int(tb)


# ----------------------------------------------------------------------------
# Wrapper
# ----------------------------------------------------------------------------
def mdca_loss(output: jax.Array, target: jax.Array, *, block_rows=None) -> jax.Array:
    """output: [batch, classes] float (any dtype); target: [batch] int labels.

    Returns a scalar float32 loss identical to the PyTorch MDCA.forward.
    """
    batch, classes = output.shape
    itemsize = output.dtype.itemsize
    align = max(8, 32 // itemsize)                     # native sublane tile

    if block_rows is None:
        block_rows = _choose_block_rows(batch, classes, itemsize)
    if block_rows >= batch:
        block_rows = batch                             # full-dim block always legal
    else:
        block_rows = max(align, block_rows - (block_rows % align))

    total_tiles = pl.cdiv(batch, block_rows)
    nsplit = _num_parallel_splits() if total_tiles >= 2 else 1
    inner_tiles = pl.cdiv(total_tiles, nsplit)

    def _tile_map(s, i):
        # Clamp so redundant steps of the split re-load the last real tile
        # (their contribution is masked to zero inside the kernel).
        return (jnp.minimum(s * inner_tiles + i, total_tiles - 1), 0)

    kernel = functools.partial(_mdca_kernel, batch=batch, inner_tiles=inner_tiles)

    conf_partial = pl.pallas_call(
        kernel,
        out_shape=jax.ShapeDtypeStruct((nsplit, 1, classes), jnp.float32),
        grid_spec=pltpu.PrefetchScalarGridSpec(
            num_scalar_prefetch=0,
            grid=(nsplit, inner_tiles),
            in_specs=[pl.BlockSpec((block_rows, classes), _tile_map)],
            out_specs=pl.BlockSpec((1, 1, classes), lambda s, i: (s, 0, 0)),
        ),
        compiler_params=pltpu.CompilerParams(
            dimension_semantics=("parallel", "arbitrary"),
            vmem_limit_bytes=_vmem_limit_bytes(),
        ),
    )(output)

    # Epilogue (tiny, plain XLA): combine per-split partial sums, subtract the
    # per-class label counts, and finish |.|-sum / (B*C).
    conf_sum = jnp.sum(conf_partial, axis=(0, 1))                       # (C,)
    counts = jnp.zeros((classes,), jnp.float32).at[target.astype(jnp.int32)].add(1.0)
    return jnp.sum(jnp.abs(conf_sum - counts)) / jnp.float32(batch * classes)


# ----------------------------------------------------------------------------
# Reference + tests
# ----------------------------------------------------------------------------
def _reference_mdca(output, target):
    # pure-JAX reference mirroring the PyTorch per-class loop
    p = jax.nn.softmax(output.astype(jnp.float32), axis=1)
    _, c = output.shape
    loss = 0.0
    for k in range(c):
        avg_count = jnp.mean((target == k).astype(jnp.float32))
        avg_conf = jnp.mean(p[:, k])
        loss = loss + jnp.abs(avg_conf - avg_count)
    return loss / c


if __name__ == "__main__":
    key = jax.random.PRNGKey(0)
    k1, k2, k3, k4, k5, k6 = jax.random.split(key, 6)

    # Small shape straight from the module spec (single tile, grid (1, 1)).
    batch, classes = 8, 5
    logits = jax.random.normal(k1, (batch, classes), dtype=jnp.float32)
    labels = jax.random.randint(k2, (batch,), 0, classes, dtype=jnp.int32)
    loss = mdca_loss(logits, labels)
    jax.block_until_ready(loss)
    ref = _reference_mdca(logits, labels)
    assert abs(float(loss) - float(ref)) < 5e-3, (float(loss), float(ref))

    # Tiled path with a masked tail and (on dual-TC chips) a redundant clamped
    # step: 5 tiles of 48 rows over batch=200.
    batch2, classes2 = 200, 7
    logits2 = jax.random.normal(k3, (batch2, classes2), dtype=jnp.float32)
    labels2 = jax.random.randint(k4, (batch2,), 0, classes2, dtype=jnp.int32)
    loss2 = mdca_loss(logits2, labels2, block_rows=48)
    jax.block_until_ready(loss2)
    ref2 = _reference_mdca(logits2, labels2)
    assert abs(float(loss2) - float(ref2)) < 5e-3, (float(loss2), float(ref2))

    # Native bf16 ingest, bf16 sublane-aligned tiles (16 rows), masked tail.
    batch3, classes3 = 100, 10
    logits3 = jax.random.normal(k5, (batch3, classes3), dtype=jnp.bfloat16)
    labels3 = jax.random.randint(k6, (batch3,), 0, classes3, dtype=jnp.int32)
    loss3 = mdca_loss(logits3, labels3, block_rows=16)
    jax.block_until_ready(loss3)
    ref3 = _reference_mdca(logits3, labels3)
    assert abs(float(loss3) - float(ref3)) < 5e-3, (float(loss3), float(ref3))

    print("KERNEL_OK")
</pallas_src>

<mosaic_0001>
module attributes {stable_mosaic.version = 11 : i64} {
  func.func @_mdca_kernel(%arg0: i32, %arg1: i32, %arg2: memref<8x5xf32, #tpu.memory_space<vmem>>, %arg3: memref<1x1x5xf32, #tpu.memory_space<vmem>>) attributes {dimension_semantics = [#tpu.dimension_semantics<parallel>, #tpu.dimension_semantics<arbitrary>], iteration_bounds = array<i64: 1, 1>, scalar_prefetch = 0 : i64, scratch_operands = 0 : i64, tpu.core_type = #tpu.core_type<tc>, window_params = [{transform_indices = @transform_0, window_bounds = array<i64: 8, 5>}, {transform_indices = @transform_1, window_bounds = array<i64: 1, 1, 5>}]} {
    %c0_i32 = arith.constant 0 : i32
    %0 = arith.cmpi eq, %arg1, %c0_i32 : i32
    %1 = arith.extui %0 : i1 to i32
    %c0_i32_0 = arith.constant 0 : i32
    %2 = arith.cmpi ne, %1, %c0_i32_0 : i32
    scf.if %2 {
      %cst = arith.constant 0.000000e+00 : f32
      %14 = vector.broadcast %cst : f32 to vector<1x1x5xf32>
      %c0_7 = arith.constant 0 : index
      %c0_8 = arith.constant 0 : index
      %c0_9 = arith.constant 0 : index
      %15 = vector.load %arg3[%c0_7, %c0_8, %c0_9] : memref<1x1x5xf32, #tpu.memory_space<vmem>>, vector<1x1x5xf32>
      tpu.vector_store %arg3[%c0_7, %c0_8, %c0_9], %14 {strides = array<i32>} : memref<1x1x5xf32, #tpu.memory_space<vmem>>, vector<1x1x5xf32>,
    } else {
    }
    %c0 = arith.constant 0 : index
    %c0_1 = arith.constant 0 : index
    %3 = vector.load %arg2[%c0, %c0_1] : memref<8x5xf32, #tpu.memory_space<vmem>>, vector<8x5xf32>
    %c1_i32 = arith.constant 1 : i32
    %4 = arith.muli %arg0, %c1_i32 : i32
    %5 = arith.addi %4, %arg1 : i32
    %c1_i32_2 = arith.constant 1 : i32
    %6 = arith.addi %5, %c1_i32_2 : i32
    %c8_i32 = arith.constant 8 : i32
    %7 = arith.muli %6, %c8_i32 : i32
    %c8_i32_3 = arith.constant 8 : i32
    %8 = arith.cmpi sle, %7, %c8_i32_3 : i32
    %9 = arith.extui %8 : i1 to i32
    %c0_i32_4 = arith.constant 0 : i32
    %10 = arith.cmpi ne, %9, %c0_i32_4 : i32
    scf.if %10 {
      %cst = arith.constant dense<0xFF800000> : vector<8xf32>
      %14 = vector.multi_reduction <maximumf>, %3, %cst [1] : vector<8x5xf32> to vector<8xf32>
      %15 = vector.shape_cast %14 : vector<8xf32> to vector<8x1xf32>
      %16 = vector.broadcast %15 : vector<8x1xf32> to vector<8x5xf32>
      %17 = arith.subf %3, %16 : vector<8x5xf32>
      %18 = math.exp %17 : vector<8x5xf32>
      %cst_7 = arith.constant dense<0.000000e+00> : vector<8xf32>
      %19 = vector.multi_reduction <add>, %18, %cst_7 [1] : vector<8x5xf32> to vector<8xf32>
      %20 = vector.shape_cast %19 : vector<8xf32> to vector<8x1xf32>
      %21 = tpu.reciprocal %20 : vector<8x1xf32> -> vector<8x1xf32>
      %22 = vector.broadcast %21 : vector<8x1xf32> to vector<8x5xf32>
      %23 = arith.mulf %18, %22 : vector<8x5xf32>
      %c0_8 = arith.constant 0 : index
      %c0_9 = arith.constant 0 : index
      %c0_10 = arith.constant 0 : index
      %24 = vector.load %arg3[%c0_8, %c0_9, %c0_10] : memref<1x1x5xf32, #tpu.memory_space<vmem>>, vector<1x1x5xf32>
      %cst_11 = arith.constant dense<0.000000e+00> : vector<5xf32>
      %25 = vector.multi_reduction <add>, %23, %cst_11 [0] : vector<8x5xf32> to vector<5xf32>
      %26 = vector.shape_cast %25 : vector<5xf32> to vector<1x5xf32>
      %27 = vector.shape_cast %26 : vector<1x5xf32> to vector<1x1x5xf32>
      %28 = arith.addf %24, %27 : vector<1x1x5xf32>
      %c0_12 = arith.constant 0 : index
      %c0_13 = arith.constant 0 : index
      %c0_14 = arith.constant 0 : index
      %29 = vector.load %arg3[%c0_12, %c0_13, %c0_14] : memref<1x1x5xf32, #tpu.memory_space<vmem>>, vector<1x1x5xf32>
      tpu.vector_store %arg3[%c0_12, %c0_13, %c0_14], %28 {strides = array<i32>} : memref<1x1x5xf32, #tpu.memory_space<vmem>>, vector<1x1x5xf32>,
    } else {
    }
    %c8_i32_5 = arith.constant 8 : i32
    %11 = arith.cmpi sgt, %7, %c8_i32_5 : i32
    %12 = arith.extui %11 : i1 to i32
    %c0_i32_6 = arith.constant 0 : i32
    %13 = arith.cmpi ne, %12, %c0_i32_6 : i32
    scf.if %13 {
      %c8_i32_7 = arith.constant 8 : i32
      %14 = arith.muli %5, %c8_i32_7 : i32
      %15 = tpu.iota {dimensions = array<i32: 0>} : vector<8x1xi32>
      %16 = vector.broadcast %14 : i32 to vector<8x1xi32>
      %17 = arith.addi %16, %15 : vector<8x1xi32>
      %c8_i32_8 = arith.constant 8 : i32
      %18 = vector.broadcast %c8_i32_8 : i32 to vector<8x1xi32>
      %19 = arith.cmpi slt, %17, %18 : vector<8x1xi32>
      %cst = arith.constant 0.000000e+00 : f32
      %20 = vector.shape_cast %19 : vector<8x1xi1> to vector<8x1xi1>
      %21 = vector.broadcast %20 : vector<8x1xi1> to vector<8x5xi1>
      %22 = vector.broadcast %cst : f32 to vector<8x5xf32>
      %23 = arith.select %21, %3, %22 : vector<8x5xi1>, vector<8x5xf32>
      %cst_9 = arith.constant dense<0xFF800000> : vector<8xf32>
      %24 = vector.multi_reduction <maximumf>, %23, %cst_9 [1] : vector<8x5xf32> to vector<8xf32>
      %25 = vector.shape_cast %24 : vector<8xf32> to vector<8x1xf32>
      %26 = vector.broadcast %25 : vector<8x1xf32> to vector<8x5xf32>
      %27 = arith.subf %23, %26 : vector<8x5xf32>
      %28 = math.exp %27 : vector<8x5xf32>
      %cst_10 = arith.constant dense<0.000000e+00> : vector<8xf32>
      %29 = vector.multi_reduction <add>, %28, %cst_10 [1] : vector<8x5xf32> to vector<8xf32>
      %30 = vector.shape_cast %29 : vector<8xf32> to vector<8x1xf32>
      %31 = tpu.reciprocal %30 : vector<8x1xf32> -> vector<8x1xf32>
      %32 = vector.broadcast %31 : vector<8x1xf32> to vector<8x5xf32>
      %33 = arith.mulf %28, %32 : vector<8x5xf32>
      %cst_11 = arith.constant 0.000000e+00 : f32
      %34 = vector.shape_cast %19 : vector<8x1xi1> to vector<8x1xi1>
      %35 = vector.broadcast %34 : vector<8x1xi1> to vector<8x5xi1>
      %36 = vector.broadcast %cst_11 : f32 to vector<8x5xf32>
      %37 = arith.select %35, %33, %36 : vector<8x5xi1>, vector<8x5xf32>
      %c0_12 = arith.constant 0 : index
      %c0_13 = arith.constant 0 : index
      %c0_14 = arith.constant 0 : index
      %38 = vector.load %arg3[%c0_12, %c0_13, %c0_14] : memref<1x1x5xf32, #tpu.memory_space<vmem>>, vector<1x1x5xf32>
      %cst_15 = arith.constant dense<0.000000e+00> : vector<5xf32>
      %39 = vector.multi_reduction <add>, %37, %cst_15 [0] : vector<8x5xf32> to vector<5xf32>
      %40 = vector.shape_cast %39 : vector<5xf32> to vector<1x5xf32>
      %41 = vector.shape_cast %40 : vector<1x5xf32> to vector<1x1x5xf32>
      %42 = arith.addf %38, %41 : vector<1x1x5xf32>
      %c0_16 = arith.constant 0 : index
      %c0_17 = arith.constant 0 : index
      %c0_18 = arith.constant 0 : index
      %43 = vector.load %arg3[%c0_16, %c0_17, %c0_18] : memref<1x1x5xf32, #tpu.memory_space<vmem>>, vector<1x1x5xf32>
      tpu.vector_store %arg3[%c0_16, %c0_17, %c0_18], %42 {strides = array<i32>} : memref<1x1x5xf32, #tpu.memory_space<vmem>>, vector<1x1x5xf32>,
    } else {
    }
    return
  }
  func.func @transform_0(%arg0: i32, %arg1: i32) -> (i32, i32) {
    %c1_i32 = arith.constant 1 : i32
    %0 = arith.muli %arg0, %c1_i32 : i32
    %1 = arith.addi %0, %arg1 : i32
    %c0_i32 = arith.constant 0 : i32
    %2 = arith.minsi %1, %c0_i32 : i32
    %c0_i32_0 = arith.constant 0 : i32
    %c0_i32_1 = arith.constant 0 : i32
    return %2, %c0_i32_0 : i32, i32
  }
  func.func @transform_1(%arg0: i32, %arg1: i32) -> (i32, i32, i32) {
    %c0_i32 = arith.constant 0 : i32
    %c0_i32_0 = arith.constant 0 : i32
    %c0_i32_1 = arith.constant 0 : i32
    return %arg0, %c0_i32, %c0_i32_0 : i32, i32, i32
  }
}

</mosaic_0001>

<llo_original>
// kernel: tpu_custom_call.1
$region0: #{tpu_custom_call.1}
  #allocation0 [shape = 'u32[]', space=smem, size = 0x4, offset = 0x4, fixed_abs, tag = 'smem constant byte address 0x4 - core index']
  #allocation1 [shape = 'u32[144,128]{1,0:T(1,128)}', space=vmem, size = 0x12000, scoped, tag = 'internal scratch']
  %s0 = inlined_call_operand.hbm [shape: f32[8,5], index: 0, kind: input, shape index: {}]
  %s1 = inlined_call_operand.hbm [shape: f32[1,1,5], index: 1, kind: output, shape index: {}]
  %s2 = sld [smem:[#allocation0]]
  $region30: #{tpu_custom_call.1} parent=0
    _
  %s4 = ssub.s32 1, %s2
  %s5 = scalar_select 0, %s4, %s2
  $region1: #{tpu_custom_call.1} parent=0
    #allocation2 [shape = 'u8[4096]{0}', space=vmem, size = 0x1000, scoped, tag = 'input window, operand 0, single buffered']
    #allocation3 [shape = 's32[1]{0}', space=sflag, size = 0x4, scoped, tag = 'scoped memory for tpu_custom_call.1']
    #allocation4 [shape = 's32[1]{0}', space=sflag, size = 0x4, scoped, tag = 'scoped memory for tpu_custom_call.1']
    #allocation5 [shape = 'u8[512]{0}', space=vmem, size = 0x400, scoped, tag = 'output window, operand 0, single buffered']
    %6 = vsyncpa [#allocation3], 0
    %7 = vsyncpa [#allocation4], 0
    // Predicated region
    $region2: #{tpu_custom_call.1} parent=1 // pred_check
      _
    $region3: #{tpu_custom_call.1} parent=1 // pred_check_branch
      %9 = sbr.rel (0) target = $region5
    $region4: #{tpu_custom_call.1} parent=1 // pred_region
      %s10 = sadd.s32 0, 0
      %p11 = scmp.lt.s32.totalorder %s10, 0
      %s12 = scalar_select %p11, %s10, 0
      %s14 = ssub.s32 128, 128
      %15 = vsyncadd [#allocation3], %s14
      %s16 = smul.addr %s12, 128
      %s17 = scalar_lea.hbm %s0, %s16
      %s19 = sshll.u32 [#allocation2], 4
      %s20 = int_to_ptr.vmem [resolvable:$true] %s19
      %22 = dma.hbm_to_vmem [thread:$0]  %s17, 128, %s20, [#allocation3]
    $region5: #{tpu_custom_call.1} parent=1 // pred_fallthru
      _
    // Predicated region
    $region6: #{tpu_custom_call.1} parent=1 // pred_check
      _
    $region7: #{tpu_custom_call.1} parent=1 // pred_check_branch
      %24 = sbr.rel (0) target = $region9
    $region8: #{tpu_custom_call.1} parent=1 // pred_region
      %25 = dma.done [#allocation3], 128
    $region9: #{tpu_custom_call.1} parent=1 // pred_fallthru
      _
    %s26 = sadd.s32 0, 0
    %p27 = scmp.lt.s32.totalorder %s26, 0
    %s28 = scalar_select %p27, %s26, 0
    %p29 = scmp.eq.s32.totalorder 0, 0
    // Predicated region
    $region10: #{tpu_custom_call.1} parent=1 // pred_check
      %p30 = pneg %p29
    $region11: #{tpu_custom_call.1} parent=1 // pred_check_branch
      %32 = sbr.rel (%p30) target = $region13
    $region12: #{tpu_custom_call.1} parent=1 // pred_region
      %vm33 = vcmask 32768
      %34 = vst.msk [vmem:[#allocation5] sm:$0x1] %vm33, 0.0
    $region13: #{tpu_custom_call.1} parent=1 // pred_fallthru
      _
    %v35 = vld [vmem:[#allocation2] sm:$0xff]
    %s36 = sadd.s32 0, 0
    %s37 = sadd.s32 %s36, 1
    %s38 = smul.u32 %s37, 8
    %p39 = scmp.le.s32.totalorder %s38, 8
    // Predicated region
    $region14: #{tpu_custom_call.1} parent=1 // pred_check
      %p40 = pneg %p39
    $region15: #{tpu_custom_call.1} parent=1 // pred_check_branch
      %42 = sbr.rel (%p40) target = $region17
    $region16: #{tpu_custom_call.1} parent=1 // pred_region
      %vm43 = vcmask 39936
      %v44 = vsel %vm43, %v35, -inf
      %45 = vmax.xlane.f32.xlu0 %v44
      %v46 = vpop.xlane.xlu0 %45
      %v47 = vsub.f32 %v35, %v46
      %v48 = vmul.f32 %v47, 1.442695
      %v49 = vpow.pop %v48
      %v50 = vsel %vm43, %v49, 0.0
      %51 = vadd.xlane.f32.xlu0 %v50
      %v52 = vpop.xlane.xlu0 %51
      %v53 = vrcp.pop %v52
      %v54 = vmul.f32 %v49, %v53
      %v55 = vld [vmem:[#allocation5] sm:$0x1]
      %v56 = vsel %vm43, %v54, 0.0
      %v57 = vrot.slane %v56, 4
      %v58 = vadd.f32 %v56, %v57
      %v59 = vrot.slane %v58, 2
      %v60 = vadd.f32 %v58, %v59
      %v61 = vrot.slane %v60, 1
      %v62 = vadd.f32 %v60, %v61
      %v63 = vadd.f32 %v55, %v62
      %vm64 = vcmask 32768
      %65 = vst.msk [vmem:[#allocation5] sm:$0x1] %vm64, %v63
    $region17: #{tpu_custom_call.1} parent=1 // pred_fallthru
      _
    %p66 = scmp.gt.s32.totalorder %s38, 8
    // Predicated region
    $region18: #{tpu_custom_call.1} parent=1 // pred_check
      %p67 = pneg %p66
    $region19: #{tpu_custom_call.1} parent=1 // pred_check_branch
      %69 = sbr.rel (%p67) target = $region21
    $region20: #{tpu_custom_call.1} parent=1 // pred_region
      %s70 = smul.u32 %s36, 8
      %v71 = vlaneseq
      %v72 = vshrl.u32 %v71, 7
      %v73 = vstv %s70
      %v74 = vadd.s32 %v73, %v72
      %vm75 = vcmp.lt.s32.totalorder %v74, 8
      %v76 = vsel %vm75, 1, 0
      %vm77 = vcmp.eq.s32.totalorder %v76, 1
      %v78 = vsel %vm77, %v35, 0.0
      %vm79 = vcmask 39936
      %v80 = vsel %vm79, %v78, -inf
      %81 = vmax.xlane.f32.xlu0 %v80
      %v82 = vpop.xlane.xlu0 %81
      %v83 = vsub.f32 %v78, %v82
      %v84 = vmul.f32 %v83, 1.442695
      %v85 = vpow.pop %v84
      %v86 = vsel %vm79, %v85, 0.0
      %87 = vadd.xlane.f32.xlu0 %v86
      %v88 = vpop.xlane.xlu0 %87
      %v89 = vrcp.pop %v88
      %v90 = vmul.f32 %v85, %v89
      %v91 = vsel %vm77, %v90, 0.0
      %v92 = vld [vmem:[#allocation5] sm:$0x1]
      %v93 = vsel %vm79, %v91, 0.0
      %v94 = vrot.slane %v93, 4
      %v95 = vadd.f32 %v93, %v94
      %v96 = vrot.slane %v95, 2
      %v97 = vadd.f32 %v95, %v96
      %v98 = vrot.slane %v97, 1
      %v99 = vadd.f32 %v97, %v98
      %v100 = vadd.f32 %v92, %v99
      %vm101 = vcmask 32768
      %102 = vst.msk [vmem:[#allocation5] sm:$0x1] %vm101, %v100
    $region21: #{tpu_custom_call.1} parent=1 // pred_fallthru
      _
    // Predicated region
    $region22: #{tpu_custom_call.1} parent=1 // pred_check
      _
    $region23: #{tpu_custom_call.1} parent=1 // pred_check_branch
      %104 = sbr.rel (0) target = $region25
    $region24: #{tpu_custom_call.1} parent=1 // pred_region
      %s106 = ssub.s32 16, 16
      %107 = vsyncadd [#allocation4], %s106
      %s109 = sshll.u32 [#allocation5], 4
      %s110 = int_to_ptr.vmem [resolvable:$true] %s109
      %112 = dma.vmem_to_hbm [thread:$0]  %s110, 16, %s1, [#allocation4]
    $region25: #{tpu_custom_call.1} parent=1 // pred_fallthru
      _
    // Predicated region
    $region26: #{tpu_custom_call.1} parent=1 // pred_check
      _
    $region27: #{tpu_custom_call.1} parent=1 // pred_check_branch
      %114 = sbr.rel (0) target = $region29
    $region28: #{tpu_custom_call.1} parent=1 // pred_region
      %115 = dma.done [#allocation4], 16
    $region29: #{tpu_custom_call.1} parent=1 // pred_fallthru
      _
    %116 = vsyncpa [#allocation3], 1
    %117 = vsyncpa [#allocation4], 1

</llo_original>
